<compile_context>
chip_gen: v5e
topology: v5e:2x2
jax: 0.10.0
libtpu: 0.0.40
codegen_flags: <defaults>
</compile_context>

<pallas_src>
import math

import jax
import jax.numpy as jnp
from jax import lax
from jax.experimental import pallas as pl
from jax.experimental.pallas import tpu as pltpu


def _pair(v):
    if isinstance(v, (tuple, list)):
        return tuple(v)
    return (v, v)


def _round_up(x, m):
    return ((x + m - 1) // m) * m


# ----------------------------- Pallas kernels ------------------------------ #

def _mm_kernel(x_ref, w_ref, o_ref):
    # x_ref: (TM, K) bf16 im2col patch tile;  w_ref: (K, OCp) bf16
    o_ref[...] = jnp.dot(x_ref[...], w_ref[...],
                         preferred_element_type=jnp.float32)


def _mm_bias_kernel(x_ref, w_ref, b_ref, o_ref):
    acc = jnp.dot(x_ref[...], w_ref[...], preferred_element_type=jnp.float32)
    o_ref[...] = acc + b_ref[...]


def _pallas_matmul(x2d, w2d, b2d=None, tile_m=512):
    """(M, K)bf16 @ (K, OCp)bf16 [+ bias] -> (M, OCp)f32, tiled over M."""
    M, K = x2d.shape
    _, OCp = w2d.shape
    # Don't use a tile taller than the (8-row-aligned) problem.
    tm = max(8, min(tile_m, _round_up(M, 8)))
    grid = (pl.cdiv(M, tm),)

    in_specs = [
        pl.BlockSpec((tm, K), lambda i: (i, 0)),      # patch tile
        pl.BlockSpec((K, OCp), lambda i: (0, 0)),     # weight (resident)
    ]
    args = [x2d, w2d]
    if b2d is not None:
        in_specs.append(pl.BlockSpec((1, OCp), lambda i: (0, 0)))
        args.append(b2d)
        kernel = _mm_bias_kernel
    else:
        kernel = _mm_kernel

    bytes_accessed = (M * K * x2d.dtype.itemsize
                      + K * OCp * w2d.dtype.itemsize
                      + M * OCp * 4
                      + (OCp * 4 if b2d is not None else 0))

    return pl.pallas_call(
        kernel,
        out_shape=jax.ShapeDtypeStruct((M, OCp), jnp.float32),
        grid_spec=pltpu.PrefetchScalarGridSpec(
            num_scalar_prefetch=0,
            grid=grid,
            in_specs=in_specs,
            out_specs=pl.BlockSpec((tm, OCp), lambda i: (i, 0)),
        ),
        compiler_params=pltpu.CompilerParams(
            dimension_semantics=("parallel",),
            vmem_limit_bytes=48 * 1024 * 1024,
        ),
        cost_estimate=pl.CostEstimate(
            flops=2 * M * K * OCp,
            transcendentals=0,
            bytes_accessed=bytes_accessed,
        ),
    )(*args)


# ------------------------------- glue (JAX) -------------------------------- #

def _im2col(x, ksize, stride, padding, dilation):
    """x: (N, Cin, H, W) -> patches (N*OH*OW, Cin*KH*KW) in x.dtype, plus OH/OW."""
    N, Cin, H, W = x.shape
    kh, kw = ksize
    sh, sw = stride
    ph, pw = padding
    dh, dw = dilation
    OH = (H + 2 * ph - dh * (kh - 1) - 1) // sh + 1
    OW = (W + 2 * pw - dw * (kw - 1) - 1) // sw + 1
    xp = jnp.pad(x, ((0, 0), (0, 0), (ph, ph), (pw, pw)))
    cols = []
    for i in range(kh):
        for j in range(kw):
            sl = xp[:, :,
                    i * dh: i * dh + sh * (OH - 1) + 1: sh,
                    j * dw: j * dw + sw * (OW - 1) + 1: sw]  # (N, Cin, OH, OW)
            cols.append(sl)
    # (N, Cin, KH*KW, OH, OW) -> (N, Cin*KH*KW, OH, OW): matches OIHW flatten order
    patches = jnp.stack(cols, axis=2).reshape(N, Cin * kh * kw, OH, OW)
    patches = jnp.transpose(patches, (0, 2, 3, 1)).reshape(
        N * OH * OW, Cin * kh * kw)
    return patches, OH, OW


def _conv2d_pallas(x, w2d, b2d, out_channels, ksize, stride, padding,
                   dilation, tile_m=512):
    """NCHW conv2d (groups=1) via bf16 im2col + Pallas matmul. Returns NCHW f32."""
    N = x.shape[0]
    patches, OH, OW = _im2col(x.astype(jnp.bfloat16), ksize, stride, padding,
                              dilation)
    out2d = _pallas_matmul(patches, w2d, b2d, tile_m=tile_m)   # (M, OCp) f32
    OCp = out2d.shape[1]
    out = out2d.reshape(N, OH, OW, OCp)
    if OCp != out_channels:
        out = out[..., :out_channels]
    # NCHW for API parity with the PyTorch module.
    return jnp.transpose(out, (0, 3, 1, 2))


# ----------------------------- module wrapper ------------------------------ #

class MultiScaleTridentConvPallas:
    def __init__(self, in_channels, out_channels, kernel_size, stride=1,
                 strides=1, paddings=0, dilations=1, dilation=1, groups=1,
                 num_branch=1, test_branch_idx=-1, bias=False,
                 norm=None, activation=None, key=None, tile_m=512):
        self.in_channels = in_channels
        self.out_channels = out_channels
        self.kernel_size = _pair(kernel_size)
        self.num_branch = num_branch
        self.stride = _pair(stride)
        self.groups = groups
        self.with_bias = bias
        self.dilation = _pair(dilation)
        if isinstance(paddings, int):
            paddings = [paddings] * num_branch
        if isinstance(dilations, int):
            dilations = [dilations] * num_branch
        if isinstance(strides, int):
            strides = [strides] * num_branch
        self.paddings = [_pair(p) for p in paddings]
        # per-branch dilations parsed for PyTorch-signature parity, but (like
        # the reference module) forward always applies the single self.dilation.
        self.dilations = [_pair(d) for d in dilations]
        self.strides = [_pair(s) for s in strides]
        self.test_branch_idx = test_branch_idx
        self.norm = norm
        self.activation = activation
        self.tile_m = tile_m
        assert len({self.num_branch, len(self.paddings), len(self.strides)}) == 1
        assert groups == 1  # TODO(synk): grouped conv not implemented in the Pallas path

        key = jax.random.PRNGKey(0) if key is None else key
        kh, kw = self.kernel_size
        fan_in = (in_channels // groups) * kh * kw
        bound = math.sqrt(6.0 / fan_in)  # kaiming_uniform_, nonlinearity='relu'
        self.weight = jax.random.uniform(
            key, (out_channels, in_channels // groups, kh, kw),
            dtype=jnp.float32, minval=-bound, maxval=bound)
        self.bias = jnp.zeros((out_channels,), jnp.float32) if bias else None

        # Precompute the flattened (K, OCp) bf16 weight once (lane-dense OC).
        K = (in_channels // groups) * kh * kw
        OCp = _round_up(out_channels, 128)
        w2d = self.weight.reshape(out_channels, K).T          # (K, OC)
        if OCp != out_channels:
            w2d = jnp.pad(w2d, ((0, 0), (0, OCp - out_channels)))
        self._w2d = w2d.astype(jnp.bfloat16)
        if bias:
            b2d = self.bias.reshape(1, out_channels).astype(jnp.float32)
            if OCp != out_channels:
                b2d = jnp.pad(b2d, ((0, 0), (0, OCp - out_channels)))
            self._b2d = b2d
        else:
            self._b2d = None

    def __call__(self, inputs, training=True):
        num_branch = self.num_branch if training or self.test_branch_idx == -1 else 1
        assert len(inputs) == num_branch
        # TODO(synk): branches could be fused into one pallas_call (scalar-prefetched
        # M offsets); kept as separate launches to avoid an extra HBM concat copy
        # of the patch matrices.
        if training or self.test_branch_idx == -1:
            outputs = [
                _conv2d_pallas(x, self._w2d, self._b2d, self.out_channels,
                               self.kernel_size, stride, padding, self.dilation,
                               tile_m=self.tile_m)
                for x, stride, padding in zip(inputs, self.strides, self.paddings)
            ]
        else:
            outputs = [
                _conv2d_pallas(inputs[0], self._w2d, self._b2d, self.out_channels,
                               self.kernel_size, self.strides[-1],
                               self.paddings[-1], self.dilation,
                               tile_m=self.tile_m)
            ]
        if self.norm is not None:
            outputs = [self.norm(x) for x in outputs]
        if self.activation is not None:
            outputs = [self.activation(x) for x in outputs]
        return outputs


# ------------------------------- reference --------------------------------- #

def _conv2d_ref(x, weight, bias, stride, padding, dilation,
                compute_dtype=jnp.float32):
    out = lax.conv_general_dilated(
        x.astype(compute_dtype), weight.astype(compute_dtype),
        window_strides=stride,
        padding=[(padding[0], padding[0]), (padding[1], padding[1])],
        rhs_dilation=dilation,
        dimension_numbers=("NCHW", "OIHW", "NCHW"),
        preferred_element_type=jnp.float32)
    if bias is not None:
        out = out + bias.reshape(1, -1, 1, 1)
    return out


if __name__ == "__main__":
    key = jax.random.PRNGKey(0)
    k_w, k_x0, k_x1, k_w2, k_x2 = jax.random.split(key, 5)

    # GMFlow-style config: shared 3x3 weight, 2 branches with strides 1 and 2.
    module = MultiScaleTridentConvPallas(
        in_channels=4, out_channels=8, kernel_size=3,
        strides=[1, 2], paddings=[1, 1], num_branch=2,
        test_branch_idx=-1, bias=False, key=k_w)

    x0 = jax.random.normal(k_x0, (2, 4, 16, 16), dtype=jnp.float32)
    x1 = jax.random.normal(k_x1, (2, 4, 16, 16), dtype=jnp.float32)
    inputs = [x0, x1]

    outputs = module(inputs, training=True)
    outputs = [jax.block_until_ready(o) for o in outputs]

    assert outputs[0].shape == (2, 8, 16, 16), outputs[0].shape
    assert outputs[1].shape == (2, 8, 8, 8), outputs[1].shape

    # Check against XLA conv with the same bf16 operand precision (f32 acc)...
    refs_bf16 = [
        _conv2d_ref(x, module.weight, module.bias, s, p, module.dilation,
                    compute_dtype=jnp.bfloat16)
        for x, s, p in zip(inputs, module.strides, module.paddings)
    ]
    for o, r in zip(outputs, refs_bf16):
        assert jnp.allclose(o, r, atol=1e-2, rtol=1e-2), \
            float(jnp.max(jnp.abs(o - r)))
    # ... and a loose sanity check against the full-f32 conv.
    refs_f32 = [
        _conv2d_ref(x, module.weight, module.bias, s, p, module.dilation)
        for x, s, p in zip(inputs, module.strides, module.paddings)
    ]
    for o, r in zip(outputs, refs_f32):
        assert jnp.allclose(o, r, atol=1e-1, rtol=1e-1), \
            float(jnp.max(jnp.abs(o - r)))

    # Coverage for the bias kernel variant (single branch).
    module_b = MultiScaleTridentConvPallas(
        in_channels=4, out_channels=8, kernel_size=3,
        strides=[1], paddings=[1], num_branch=1,
        test_branch_idx=-1, bias=True, key=k_w2)
    x2 = jax.random.normal(k_x2, (2, 4, 16, 16), dtype=jnp.float32)
    out_b = module_b([x2], training=True)[0]
    out_b = jax.block_until_ready(out_b)
    ref_b = _conv2d_ref(x2, module_b.weight, module_b.bias,
                        module_b.strides[0], module_b.paddings[0],
                        module_b.dilation, compute_dtype=jnp.bfloat16)
    assert out_b.shape == (2, 8, 16, 16), out_b.shape
    assert jnp.allclose(out_b, ref_b, atol=1e-2, rtol=1e-2)

    print("KERNEL_OK")
</pallas_src>

<mosaic_0001>
module attributes {stable_mosaic.version = 11 : i64} {
  func.func @_mm_kernel(%arg0: i32, %arg1: memref<512x36xbf16, #tpu.memory_space<vmem>>, %arg2: memref<36x128xbf16, #tpu.memory_space<vmem>>, %arg3: memref<512x128xf32, #tpu.memory_space<vmem>>) attributes {dimension_semantics = [#tpu.dimension_semantics<parallel>], iteration_bounds = array<i64: 1>, scalar_prefetch = 0 : i64, scratch_operands = 0 : i64, tpu.core_type = #tpu.core_type<tc>, window_params = [{transform_indices = @transform_0, window_bounds = array<i64: 512, 36>}, {pipeline_mode = #tpu.pipeline_mode<synchronous>, transform_indices = @transform_1, window_bounds = array<i64: 36, 128>}, {transform_indices = @transform_2, window_bounds = array<i64: 512, 128>}]} {
    %c0 = arith.constant 0 : index
    %c0_0 = arith.constant 0 : index
    %0 = vector.load %arg1[%c0, %c0_0] : memref<512x36xbf16, #tpu.memory_space<vmem>>, vector<512x36xbf16>
    %c0_1 = arith.constant 0 : index
    %c0_2 = arith.constant 0 : index
    %1 = vector.load %arg2[%c0_1, %c0_2] : memref<36x128xbf16, #tpu.memory_space<vmem>>, vector<36x128xbf16>
    %cst = arith.constant dense<0.000000e+00> : vector<512x128xf32>
    %2 = tpu.matmul %0, %1, %cst {dimension_numbers = #tpu.dot_dimension_numbers<[1], [0], [0], [1], [0, 0, 1, 1], [], []>} : vector<512x36xbf16>, vector<36x128xbf16>, vector<512x128xf32> -> vector<512x128xf32>
    %c0_3 = arith.constant 0 : index
    %c0_4 = arith.constant 0 : index
    %3 = vector.load %arg3[%c0_3, %c0_4] : memref<512x128xf32, #tpu.memory_space<vmem>>, vector<512x128xf32>
    tpu.vector_store %arg3[%c0_3, %c0_4], %2 {strides = array<i32>} : memref<512x128xf32, #tpu.memory_space<vmem>>, vector<512x128xf32>,
    return
  }
  func.func @transform_0(%arg0: i32) -> (i32, i32) {
    %c0_i32 = arith.constant 0 : i32
    %c0_i32_0 = arith.constant 0 : i32
    return %arg0, %c0_i32 : i32, i32
  }
  func.func @transform_1(%arg0: i32) -> (i32, i32) {
    %c0_i32 = arith.constant 0 : i32
    %c0_i32_0 = arith.constant 0 : i32
    %c0_i32_1 = arith.constant 0 : i32
    return %c0_i32, %c0_i32_0 : i32, i32
  }
  func.func @transform_2(%arg0: i32) -> (i32, i32) {
    %c0_i32 = arith.constant 0 : i32
    %c0_i32_0 = arith.constant 0 : i32
    return %arg0, %c0_i32 : i32, i32
  }
}

</mosaic_0001>

<llo_original>
// kernel: tpu_custom_call.1
$region0: #{tpu_custom_call.1}
  #allocation0 [shape = 'u32[]', space=smem, size = 0x4, offset = 0x4, fixed_abs, tag = 'smem constant byte address 0x4 - core index']
  #allocation1 [shape = 'u32[72,128]{1,0:T(1,128)}', space=vmem, size = 0x9000, scoped, tag = 'internal scratch']
  %s0 = inlined_call_operand.vmem [shape: bf16[512,36], index: 0, kind: input, shape index: {}]
  %s1 = inlined_call_operand.vmem [shape: bf16[36,128], index: 1, kind: input, shape index: {}]
  %s2 = inlined_call_operand.hbm [shape: f32[512,128], index: 2, kind: output, shape index: {}]
  %s3 = sld [smem:[#allocation0]]
  $region18: #{tpu_custom_call.1} parent=0
    _
  %s5 = ssub.s32 1, %s3
  %s6 = scalar_select 0, %s5, %s3
  $region1: #{tpu_custom_call.1} parent=0
    #allocation2 [shape = 'u8[262144]{0}', space=vmem, size = 0x40000, scoped, tag = 'output window, operand 0, single buffered']
    #allocation3 [shape = 's32[1]{0}', space=sflag, size = 0x4, scoped, tag = 'scoped memory for tpu_custom_call.1']
    %7 = vsyncpa [#allocation3], 0
    // Predicated region
    $region2: #{tpu_custom_call.1} parent=1 // pred_check
      _
    $region3: #{tpu_custom_call.1} parent=1 // pred_check_branch
      %9 = sbr.rel (0) target = $region5
    $region4: #{tpu_custom_call.1} parent=1 // pred_region
      _
    $region5: #{tpu_custom_call.1} parent=1 // pred_fallthru
      _
    // Predicated region
    $region6: #{tpu_custom_call.1} parent=1 // pred_check
      _
    $region7: #{tpu_custom_call.1} parent=1 // pred_check_branch
      %11 = sbr.rel (0) target = $region9
    $region8: #{tpu_custom_call.1} parent=1 // pred_region
      _
    $region9: #{tpu_custom_call.1} parent=1 // pred_fallthru
      _
    %v13 = vld [vmem:[%s0] sm:$0xf]
    %v14 = vld [vmem:[%s0 + $0x4] sm:$0xf]
    %v15 = vld [vmem:[%s0 + $0x8] sm:$0xf]
    %v16 = vld [vmem:[%s0 + $0xc] sm:$0xf]
    %v17 = vld [vmem:[%s0 + $0x10] sm:$0xf]
    %v18 = vld [vmem:[%s0 + $0x14] sm:$0xf]
    %v19 = vld [vmem:[%s0 + $0x18] sm:$0xf]
    %v20 = vld [vmem:[%s0 + $0x1c] sm:$0xf]
    %v21 = vld [vmem:[%s0 + $0x20] sm:$0xf]
    %v22 = vld [vmem:[%s0 + $0x24] sm:$0xf]
    %v23 = vld [vmem:[%s0 + $0x28] sm:$0xf]
    %v24 = vld [vmem:[%s0 + $0x2c] sm:$0xf]
    %v25 = vld [vmem:[%s0 + $0x30] sm:$0xf]
    %v26 = vld [vmem:[%s0 + $0x34] sm:$0xf]
    %v27 = vld [vmem:[%s0 + $0x38] sm:$0xf]
    %v28 = vld [vmem:[%s0 + $0x3c] sm:$0xf]
    %v29 = vld [vmem:[%s0 + $0x40] sm:$0xf]
    %v30 = vld [vmem:[%s0 + $0x44] sm:$0xf]
    %v31 = vld [vmem:[%s0 + $0x48] sm:$0xf]
    %v32 = vld [vmem:[%s0 + $0x4c] sm:$0xf]
    %v33 = vld [vmem:[%s0 + $0x50] sm:$0xf]
    %v34 = vld [vmem:[%s0 + $0x54] sm:$0xf]
    %v35 = vld [vmem:[%s0 + $0x58] sm:$0xf]
    %v36 = vld [vmem:[%s0 + $0x5c] sm:$0xf]
    %v37 = vld [vmem:[%s0 + $0x60] sm:$0xf]
    %v38 = vld [vmem:[%s0 + $0x64] sm:$0xf]
    %v39 = vld [vmem:[%s0 + $0x68] sm:$0xf]
    %v40 = vld [vmem:[%s0 + $0x6c] sm:$0xf]
    %v41 = vld [vmem:[%s0 + $0x70] sm:$0xf]
    %v42 = vld [vmem:[%s0 + $0x74] sm:$0xf]
    %v43 = vld [vmem:[%s0 + $0x78] sm:$0xf]
    %v44 = vld [vmem:[%s0 + $0x7c] sm:$0xf]
    %v45 = vld [vmem:[%s0 + $0x80] sm:$0xf]
    %v46 = vld [vmem:[%s0 + $0x84] sm:$0xf]
    %v47 = vld [vmem:[%s0 + $0x88] sm:$0xf]
    %v48 = vld [vmem:[%s0 + $0x8c] sm:$0xf]
    %v49 = vld [vmem:[%s0 + $0x90] sm:$0xf]
    %v50 = vld [vmem:[%s0 + $0x94] sm:$0xf]
    %v51 = vld [vmem:[%s0 + $0x98] sm:$0xf]
    %v52 = vld [vmem:[%s0 + $0x9c] sm:$0xf]
    %v53 = vld [vmem:[%s0 + $0xa0] sm:$0xf]
    %v54 = vld [vmem:[%s0 + $0xa4] sm:$0xf]
    %v55 = vld [vmem:[%s0 + $0xa8] sm:$0xf]
    %v56 = vld [vmem:[%s0 + $0xac] sm:$0xf]
    %v57 = vld [vmem:[%s0 + $0xb0] sm:$0xf]
    %v58 = vld [vmem:[%s0 + $0xb4] sm:$0xf]
    %v59 = vld [vmem:[%s0 + $0xb8] sm:$0xf]
    %v60 = vld [vmem:[%s0 + $0xbc] sm:$0xf]
    %v61 = vld [vmem:[%s0 + $0xc0] sm:$0xf]
    %v62 = vld [vmem:[%s0 + $0xc4] sm:$0xf]
    %v63 = vld [vmem:[%s0 + $0xc8] sm:$0xf]
    %v64 = vld [vmem:[%s0 + $0xcc] sm:$0xf]
    %v65 = vld [vmem:[%s0 + $0xd0] sm:$0xf]
    %v66 = vld [vmem:[%s0 + $0xd4] sm:$0xf]
    %v67 = vld [vmem:[%s0 + $0xd8] sm:$0xf]
    %v68 = vld [vmem:[%s0 + $0xdc] sm:$0xf]
    %v69 = vld [vmem:[%s0 + $0xe0] sm:$0xf]
    %v70 = vld [vmem:[%s0 + $0xe4] sm:$0xf]
    %v71 = vld [vmem:[%s0 + $0xe8] sm:$0xf]
    %v72 = vld [vmem:[%s0 + $0xec] sm:$0xf]
    %v73 = vld [vmem:[%s0 + $0xf0] sm:$0xf]
    %v74 = vld [vmem:[%s0 + $0xf4] sm:$0xf]
    %v75 = vld [vmem:[%s0 + $0xf8] sm:$0xf]
    %v76 = vld [vmem:[%s0 + $0xfc] sm:$0xf]
    %v77 = vld [vmem:[%s1] sm:$0xf]
    %v78 = vld [vmem:[%s1 + $0x4] sm:$0xf]
    %v79 = vld [vmem:[%s1 + $0x8] sm:$0xf]
    %v80 = vld [vmem:[%s1 + $0xc] sm:$0xf]
    %v81 = vld [vmem:[%s1 + $0x10] sm:$0x3]
    %v146 = vunpack.c.l.b16 %v13
    %v147 = vunpack.c.l.b16 %v14
    %v148 = vunpack.c.l.b16 %v15
    %v149 = vunpack.c.l.b16 %v16
    %v150 = vunpack.c.l.b16 %v17
    %v151 = vunpack.c.l.b16 %v18
    %v152 = vunpack.c.l.b16 %v19
    %v153 = vunpack.c.l.b16 %v20
    %v154 = vunpack.c.l.b16 %v21
    %v155 = vunpack.c.l.b16 %v22
    %v156 = vunpack.c.l.b16 %v23
    %v157 = vunpack.c.l.b16 %v24
    %v158 = vunpack.c.l.b16 %v25
    %v159 = vunpack.c.l.b16 %v26
    %v160 = vunpack.c.l.b16 %v27
    %v161 = vunpack.c.l.b16 %v28
    %v162 = vunpack.c.l.b16 %v29
    %v163 = vunpack.c.l.b16 %v30
    %v164 = vunpack.c.l.b16 %v31
    %v165 = vunpack.c.l.b16 %v32
    %v166 = vunpack.c.l.b16 %v33
    %v167 = vunpack.c.l.b16 %v34
    %v168 = vunpack.c.l.b16 %v35
    %v169 = vunpack.c.l.b16 %v36
    %v170 = vunpack.c.l.b16 %v37
    %v171 = vunpack.c.l.b16 %v38
    %v172 = vunpack.c.l.b16 %v39
    %v173 = vunpack.c.l.b16 %v40
    %v174 = vunpack.c.l.b16 %v41
    %v175 = vunpack.c.l.b16 %v42
    %v176 = vunpack.c.l.b16 %v43
    %v177 = vunpack.c.l.b16 %v44
    %v178 = vunpack.c.l.b16 %v45
    %v179 = vunpack.c.l.b16 %v46
    %v180 = vunpack.c.l.b16 %v47
    %v181 = vunpack.c.l.b16 %v48
    %v182 = vunpack.c.l.b16 %v49
    %v183 = vunpack.c.l.b16 %v50
    %v184 = vunpack.c.l.b16 %v51
    %v185 = vunpack.c.l.b16 %v52
    %v186 = vunpack.c.l.b16 %v53
    %v187 = vunpack.c.l.b16 %v54
    %v188 = vunpack.c.l.b16 %v55
    %v189 = vunpack.c.l.b16 %v56
    %v190 = vunpack.c.l.b16 %v57
    %v191 = vunpack.c.l.b16 %v58
    %v192 = vunpack.c.l.b16 %v59
    %v193 = vunpack.c.l.b16 %v60
    %v194 = vunpack.c.l.b16 %v61
    %v195 = vunpack.c.l.b16 %v62
    %v196 = vunpack.c.l.b16 %v63
    %v197 = vunpack.c.l.b16 %v64
    %v198 = vunpack.c.l.b16 %v65
    %v199 = vunpack.c.l.b16 %v66
    %v200 = vunpack.c.l.b16 %v67
    %v201 = vunpack.c.l.b16 %v68
    %v202 = vunpack.c.l.b16 %v69
    %v203 = vunpack.c.l.b16 %v70
    %v204 = vunpack.c.l.b16 %v71
    %v205 = vunpack.c.l.b16 %v72
    %v206 = vunpack.c.l.b16 %v73
    %v207 = vunpack.c.l.b16 %v74
    %v208 = vunpack.c.l.b16 %v75
    %v209 = vunpack.c.l.b16 %v76
    %v210 = vpack.c.b16 %v147, %v146
    %v211 = vpack.c.b16 %v149, %v148
    %v212 = vpack.c.b16 %v151, %v150
    %v213 = vpack.c.b16 %v153, %v152
    %v214 = vpack.c.b16 %v155, %v154
    %v215 = vpack.c.b16 %v157, %v156
    %v216 = vpack.c.b16 %v159, %v158
    %v217 = vpack.c.b16 %v161, %v160
    %v218 = vpack.c.b16 %v163, %v162
    %v219 = vpack.c.b16 %v165, %v164
    %v220 = vpack.c.b16 %v167, %v166
    %v221 = vpack.c.b16 %v169, %v168
    %v222 = vpack.c.b16 %v171, %v170
    %v223 = vpack.c.b16 %v173, %v172
    %v224 = vpack.c.b16 %v175, %v174
    %v225 = vpack.c.b16 %v177, %v176
    %v226 = vpack.c.b16 %v179, %v178
    %v227 = vpack.c.b16 %v181, %v180
    %v228 = vpack.c.b16 %v183, %v182
    %v229 = vpack.c.b16 %v185, %v184
    %v230 = vpack.c.b16 %v187, %v186
    %v231 = vpack.c.b16 %v189, %v188
    %v232 = vpack.c.b16 %v191, %v190
    %v233 = vpack.c.b16 %v193, %v192
    %v234 = vpack.c.b16 %v195, %v194
    %v235 = vpack.c.b16 %v197, %v196
    %v236 = vpack.c.b16 %v199, %v198
    %v237 = vpack.c.b16 %v201, %v200
    %v238 = vpack.c.b16 %v203, %v202
    %v239 = vpack.c.b16 %v205, %v204
    %v240 = vpack.c.b16 %v207, %v206
    %v241 = vpack.c.b16 %v209, %v208
    %v247 = vunpack.c.l.b16 %v77
    %v248 = vunpack.c.l.b16 %v78
    %v249 = vunpack.c.l.b16 %v79
    %v250 = vunpack.c.l.b16 %v80
    %v251 = vunpack.c.l.b16 %v81
    %v252 = vpack.c.b16 %v248, %v247
    %v253 = vpack.c.b16 %v250, %v249
    %v254 = vpack.c.b16 %v251, %v251
    %vm257 = vcmask 293888
    %v259 = vsel %vm257, %v210, 0
    %v262 = vsel %vm257, %v211, 0
    %v265 = vsel %vm257, %v212, 0
    %v268 = vsel %vm257, %v213, 0
    %v271 = vsel %vm257, %v214, 0
    %v274 = vsel %vm257, %v215, 0
    %v277 = vsel %vm257, %v216, 0
    %v280 = vsel %vm257, %v217, 0
    %v283 = vsel %vm257, %v218, 0
    %v286 = vsel %vm257, %v219, 0
    %v289 = vsel %vm257, %v220, 0
    %v292 = vsel %vm257, %v221, 0
    %v295 = vsel %vm257, %v222, 0
    %v298 = vsel %vm257, %v223, 0
    %v301 = vsel %vm257, %v224, 0
    %v304 = vsel %vm257, %v225, 0
    %v307 = vsel %vm257, %v226, 0
    %v310 = vsel %vm257, %v227, 0
    %v313 = vsel %vm257, %v228, 0
    %v316 = vsel %vm257, %v229, 0
    %v319 = vsel %vm257, %v230, 0
    %v322 = vsel %vm257, %v231, 0
    %v325 = vsel %vm257, %v232, 0
    %v328 = vsel %vm257, %v233, 0
    %v331 = vsel %vm257, %v234, 0
    %v334 = vsel %vm257, %v235, 0
    %v337 = vsel %vm257, %v236, 0
    %v340 = vsel %vm257, %v237, 0
    %v343 = vsel %vm257, %v238, 0
    %v346 = vsel %vm257, %v239, 0
    %v349 = vsel %vm257, %v240, 0
    %v352 = vsel %vm257, %v241, 0
    %vm354 = vcmask 1041408
    %v356 = vsel %vm354, %v254, 0
    %358 = vmatpush.bf16.msra.mxu0 0
    %359 = vmatpush.bf16.msra.mxu0 0
    %360 = vmatpush.bf16.msra.mxu0 0
    %361 = vmatpush.bf16.msra.mxu0 0
    %362 = vmatpush.bf16.msra.mxu0 0
    %363 = vmatpush.bf16.msra.mxu0 %v356
    %364 = vmatpush.bf16.msra.mxu0 %v253
    %365 = vmatpush.bf16.msra.mxu0 %v252
    %366 = vmatmul.bf16.gmra.mxu0 %v259
    %v367 = vpop.f32.mrf.mxu0
    %v368 = vadd.f32 0.0, %v367
    %v369 = vpop.f32.mrf.mxu0
    %v370 = vadd.f32 0.0, %v369
    %371 = vmatmul.bf16.gmra.mxu0 %v262
    %v372 = vpop.f32.mrf.mxu0
    %v373 = vadd.f32 0.0, %v372
    %v374 = vpop.f32.mrf.mxu0
    %v375 = vadd.f32 0.0, %v374
    %376 = vmatmul.bf16.gmra.mxu0 %v265
    %v377 = vpop.f32.mrf.mxu0
    %v378 = vadd.f32 0.0, %v377
    %v379 = vpop.f32.mrf.mxu0
    %v380 = vadd.f32 0.0, %v379
    %381 = vmatmul.bf16.gmra.mxu0 %v268
    %v382 = vpop.f32.mrf.mxu0
    %v383 = vadd.f32 0.0, %v382
    %v384 = vpop.f32.mrf.mxu0
    %v385 = vadd.f32 0.0, %v384
    %386 = vmatmul.bf16.gmra.mxu0 %v271
    %v387 = vpop.f32.mrf.mxu0
    %v388 = vadd.f32 0.0, %v387
    %v389 = vpop.f32.mrf.mxu0
    %v390 = vadd.f32 0.0, %v389
    %391 = vmatmul.bf16.gmra.mxu0 %v274
    %v392 = vpop.f32.mrf.mxu0
    %v393 = vadd.f32 0.0, %v392
    %v394 = vpop.f32.mrf.mxu0
    %v395 = vadd.f32 0.0, %v394
    %396 = vmatmul.bf16.gmra.mxu0 %v277
    %v397 = vpop.f32.mrf.mxu0
    %v398 = vadd.f32 0.0, %v397
    %v399 = vpop.f32.mrf.mxu0
    %v400 = vadd.f32 0.0, %v399
    %401 = vmatmul.bf16.gmra.mxu0 %v280
    %v402 = vpop.f32.mrf.mxu0
    %v403 = vadd.f32 0.0, %v402
    %v404 = vpop.f32.mrf.mxu0
    %v405 = vadd.f32 0.0, %v404
    %406 = vmatmul.bf16.gmra.mxu0 %v283
    %v407 = vpop.f32.mrf.mxu0
    %v408 = vadd.f32 0.0, %v407
    %v409 = vpop.f32.mrf.mxu0
    %v410 = vadd.f32 0.0, %v409
    %411 = vmatmul.bf16.gmra.mxu0 %v286
    %v412 = vpop.f32.mrf.mxu0
    %v413 = vadd.f32 0.0, %v412
    %v414 = vpop.f32.mrf.mxu0
    %v415 = vadd.f32 0.0, %v414
    %416 = vmatmul.bf16.gmra.mxu0 %v289
    %v417 = vpop.f32.mrf.mxu0
    %v418 = vadd.f32 0.0, %v417
    %v419 = vpop.f32.mrf.mxu0
    %v420 = vadd.f32 0.0, %v419
    %421 = vmatmul.bf16.gmra.mxu0 %v292
    %v422 = vpop.f32.mrf.mxu0
    %v423 = vadd.f32 0.0, %v422
    %v424 = vpop.f32.mrf.mxu0
    %v425 = vadd.f32 0.0, %v424
    %426 = vmatmul.bf16.gmra.mxu0 %v295
    %v427 = vpop.f32.mrf.mxu0
    %v428 = vadd.f32 0.0, %v427
    %v429 = vpop.f32.mrf.mxu0
    %v430 = vadd.f32 0.0, %v429
    %431 = vmatmul.bf16.gmra.mxu0 %v298
    %v432 = vpop.f32.mrf.mxu0
    %v433 = vadd.f32 0.0, %v432
    %v434 = vpop.f32.mrf.mxu0
    %v435 = vadd.f32 0.0, %v434
    %436 = vmatmul.bf16.gmra.mxu0 %v301
    %v437 = vpop.f32.mrf.mxu0
    %v438 = vadd.f32 0.0, %v437
    %v439 = vpop.f32.mrf.mxu0
    %v440 = vadd.f32 0.0, %v439
    %441 = vmatmul.bf16.gmra.mxu0 %v304
    %v442 = vpop.f32.mrf.mxu0
    %v443 = vadd.f32 0.0, %v442
    %v444 = vpop.f32.mrf.mxu0
    %v445 = vadd.f32 0.0, %v444
    %446 = vmatmul.bf16.gmra.mxu0 %v307
    %v447 = vpop.f32.mrf.mxu0
    %v448 = vadd.f32 0.0, %v447
    %v449 = vpop.f32.mrf.mxu0
    %v450 = vadd.f32 0.0, %v449
    %451 = vmatmul.bf16.gmra.mxu0 %v310
    %v452 = vpop.f32.mrf.mxu0
    %v453 = vadd.f32 0.0, %v452
    %v454 = vpop.f32.mrf.mxu0
    %v455 = vadd.f32 0.0, %v454
    %456 = vmatmul.bf16.gmra.mxu0 %v313
    %v457 = vpop.f32.mrf.mxu0
    %v458 = vadd.f32 0.0, %v457
    %v459 = vpop.f32.mrf.mxu0
    %v460 = vadd.f32 0.0, %v459
    %461 = vmatmul.bf16.gmra.mxu0 %v316
    %v462 = vpop.f32.mrf.mxu0
    %v463 = vadd.f32 0.0, %v462
    %v464 = vpop.f32.mrf.mxu0
    %v465 = vadd.f32 0.0, %v464
    %466 = vmatmul.bf16.gmra.mxu0 %v319
    %v467 = vpop.f32.mrf.mxu0
    %v468 = vadd.f32 0.0, %v467
    %v469 = vpop.f32.mrf.mxu0
    %v470 = vadd.f32 0.0, %v469
    %471 = vmatmul.bf16.gmra.mxu0 %v322
    %v472 = vpop.f32.mrf.mxu0
    %v473 = vadd.f32 0.0, %v472
    %v474 = vpop.f32.mrf.mxu0
    %v475 = vadd.f32 0.0, %v474
    %476 = vmatmul.bf16.gmra.mxu0 %v325
    %v477 = vpop.f32.mrf.mxu0
    %v478 = vadd.f32 0.0, %v477
    %v479 = vpop.f32.mrf.mxu0
    %v480 = vadd.f32 0.0, %v479
    %481 = vmatmul.bf16.gmra.mxu0 %v328
    %v482 = vpop.f32.mrf.mxu0
    %v483 = vadd.f32 0.0, %v482
    %v484 = vpop.f32.mrf.mxu0
    %v485 = vadd.f32 0.0, %v484
    %486 = vmatmul.bf16.gmra.mxu0 %v331
    %v487 = vpop.f32.mrf.mxu0
    %v488 = vadd.f32 0.0, %v487
    %v489 = vpop.f32.mrf.mxu0
    %v490 = vadd.f32 0.0, %v489
    %491 = vmatmul.bf16.gmra.mxu0 %v334
    %v492 = vpop.f32.mrf.mxu0
    %v493 = vadd.f32 0.0, %v492
    %v494 = vpop.f32.mrf.mxu0
    %v495 = vadd.f32 0.0, %v494
    %496 = vmatmul.bf16.gmra.mxu0 %v337
    %v497 = vpop.f32.mrf.mxu0
    %v498 = vadd.f32 0.0, %v497
    %v499 = vpop.f32.mrf.mxu0
    %v500 = vadd.f32 0.0, %v499
    %501 = vmatmul.bf16.gmra.mxu0 %v340
    %v502 = vpop.f32.mrf.mxu0
    %v503 = vadd.f32 0.0, %v502
    %v504 = vpop.f32.mrf.mxu0
    %v505 = vadd.f32 0.0, %v504
    %506 = vmatmul.bf16.gmra.mxu0 %v343
    %v507 = vpop.f32.mrf.mxu0
    %v508 = vadd.f32 0.0, %v507
    %v509 = vpop.f32.mrf.mxu0
    %v510 = vadd.f32 0.0, %v509
    %511 = vmatmul.bf16.gmra.mxu0 %v346
    %v512 = vpop.f32.mrf.mxu0
    %v513 = vadd.f32 0.0, %v512
    %v514 = vpop.f32.mrf.mxu0
    %v515 = vadd.f32 0.0, %v514
    %516 = vmatmul.bf16.gmra.mxu0 %v349
    %v517 = vpop.f32.mrf.mxu0
    %v518 = vadd.f32 0.0, %v517
    %v519 = vpop.f32.mrf.mxu0
    %v520 = vadd.f32 0.0, %v519
    %521 = vmatmul.bf16.gmra.mxu0 %v352
    %v522 = vpop.f32.mrf.mxu0
    %v523 = vadd.f32 0.0, %v522
    %v524 = vpop.f32.mrf.mxu0
    %v525 = vadd.f32 0.0, %v524
    %526 = vdwg.mxu0
    %527 = vst [vmem:[#allocation2] sm:$0xff] %v368
    %528 = vst [vmem:[#allocation2 + $0x8] sm:$0xff] %v370
    %529 = vst [vmem:[#allocation2 + $0x10] sm:$0xff] %v373
    %530 = vst [vmem:[#allocation2 + $0x18] sm:$0xff] %v375
    %531 = vst [vmem:[#allocation2 + $0x20] sm:$0xff] %v378
    %532 = vst [vmem:[#allocation2 + $0x28] sm:$0xff] %v380
    %533 = vst [vmem:[#allocation2 + $0x30] sm:$0xff] %v383
    %534 = vst [vmem:[#allocation2 + $0x38] sm:$0xff] %v385
    %535 = vst [vmem:[#allocation2 + $0x40] sm:$0xff] %v388
    %536 = vst [vmem:[#allocation2 + $0x48] sm:$0xff] %v390
    %537 = vst [vmem:[#allocation2 + $0x50] sm:$0xff] %v393
    %538 = vst [vmem:[#allocation2 + $0x58] sm:$0xff] %v395
    %539 = vst [vmem:[#allocation2 + $0x60] sm:$0xff] %v398
    %540 = vst [vmem:[#allocation2 + $0x68] sm:$0xff] %v400
    %541 = vst [vmem:[#allocation2 + $0x70] sm:$0xff] %v403
    %542 = vst [vmem:[#allocation2 + $0x78] sm:$0xff] %v405
    %543 = vst [vmem:[#allocation2 + $0x80] sm:$0xff] %v408
    %544 = vst [vmem:[#allocation2 + $0x88] sm:$0xff] %v410
    %545 = vst [vmem:[#allocation2 + $0x90] sm:$0xff] %v413
    %546 = vst [vmem:[#allocation2 + $0x98] sm:$0xff] %v415
    %547 = vst [vmem:[#allocation2 + $0xa0] sm:$0xff] %v418
    %548 = vst [vmem:[#allocation2 + $0xa8] sm:$0xff] %v420
    %549 = vst [vmem:[#allocation2 + $0xb0] sm:$0xff] %v423
    %550 = vst [vmem:[#allocation2 + $0xb8] sm:$0xff] %v425
    %551 = vst [vmem:[#allocation2 + $0xc0] sm:$0xff] %v428
    %552 = vst [vmem:[#allocation2 + $0xc8] sm:$0xff] %v430
    %553 = vst [vmem:[#allocation2 + $0xd0] sm:$0xff] %v433
    %554 = vst [vmem:[#allocation2 + $0xd8] sm:$0xff] %v435
    %555 = vst [vmem:[#allocation2 + $0xe0] sm:$0xff] %v438
    %556 = vst [vmem:[#allocation2 + $0xe8] sm:$0xff] %v440
    %557 = vst [vmem:[#allocation2 + $0xf0] sm:$0xff] %v443
    %558 = vst [vmem:[#allocation2 + $0xf8] sm:$0xff] %v445
    %559 = vst [vmem:[#allocation2 + $0x100] sm:$0xff] %v448
    %560 = vst [vmem:[#allocation2 + $0x108] sm:$0xff] %v450
    %561 = vst [vmem:[#allocation2 + $0x110] sm:$0xff] %v453
    %562 = vst [vmem:[#allocation2 + $0x118] sm:$0xff] %v455
    %563 = vst [vmem:[#allocation2 + $0x120] sm:$0xff] %v458
    %564 = vst [vmem:[#allocation2 + $0x128] sm:$0xff] %v460
    %565 = vst [vmem:[#allocation2 + $0x130] sm:$0xff] %v463
    %566 = vst [vmem:[#allocation2 + $0x138] sm:$0xff] %v465
    %567 = vst [vmem:[#allocation2 + $0x140] sm:$0xff] %v468
    %568 = vst [vmem:[#allocation2 + $0x148] sm:$0xff] %v470
    %569 = vst [vmem:[#allocation2 + $0x150] sm:$0xff] %v473
    %570 = vst [vmem:[#allocation2 + $0x158] sm:$0xff] %v475
    %571 = vst [vmem:[#allocation2 + $0x160] sm:$0xff] %v478
    %572 = vst [vmem:[#allocation2 + $0x168] sm:$0xff] %v480
    %573 = vst [vmem:[#allocation2 + $0x170] sm:$0xff] %v483
    %574 = vst [vmem:[#allocation2 + $0x178] sm:$0xff] %v485
    %575 = vst [vmem:[#allocation2 + $0x180] sm:$0xff] %v488
    %576 = vst [vmem:[#allocation2 + $0x188] sm:$0xff] %v490
    %577 = vst [vmem:[#allocation2 + $0x190] sm:$0xff] %v493
    %578 = vst [vmem:[#allocation2 + $0x198] sm:$0xff] %v495
    %579 = vst [vmem:[#allocation2 + $0x1a0] sm:$0xff] %v498
    %580 = vst [vmem:[#allocation2 + $0x1a8] sm:$0xff] %v500
    %581 = vst [vmem:[#allocation2 + $0x1b0] sm:$0xff] %v503
    %582 = vst [vmem:[#allocation2 + $0x1b8] sm:$0xff] %v505
    %583 = vst [vmem:[#allocation2 + $0x1c0] sm:$0xff] %v508
    %584 = vst [vmem:[#allocation2 + $0x1c8] sm:$0xff] %v510
    %585 = vst [vmem:[#allocation2 + $0x1d0] sm:$0xff] %v513
    %586 = vst [vmem:[#allocation2 + $0x1d8] sm:$0xff] %v515
    %587 = vst [vmem:[#allocation2 + $0x1e0] sm:$0xff] %v518
    %588 = vst [vmem:[#allocation2 + $0x1e8] sm:$0xff] %v520
    %589 = vst [vmem:[#allocation2 + $0x1f0] sm:$0xff] %v523
    %590 = vst [vmem:[#allocation2 + $0x1f8] sm:$0xff] %v525
    // Predicated region
    $region10: #{tpu_custom_call.1} parent=1 // pred_check
      _
    $region11: #{tpu_custom_call.1} parent=1 // pred_check_branch
      %592 = sbr.rel (0) target = $region13
    $region12: #{tpu_custom_call.1} parent=1 // pred_region
      %594 = vsyncadd [#allocation3], 0
      %s595 = sshll.u32 [#allocation2], 4
      %s596 = int_to_ptr.vmem [resolvable:$true] %s595
      %s597 = sshll.u32 %s2, 4
      %s598 = int_to_ptr.hbm [resolvable:$true] %s597
      %603 = dma.vmem_to_hbm [thread:$0]  %s596, 8192, %s598, [#allocation3], 128, 128, 8
    $region13: #{tpu_custom_call.1} parent=1 // pred_fallthru
      _
    // Predicated region
    $region14: #{tpu_custom_call.1} parent=1 // pred_check
      _
    $region15: #{tpu_custom_call.1} parent=1 // pred_check_branch
      %605 = sbr.rel (0) target = $region17
    $region16: #{tpu_custom_call.1} parent=1 // pred_region
      %607 = dma.done [#allocation3], 8192
    $region17: #{tpu_custom_call.1} parent=1 // pred_fallthru
      _
    %608 = vsyncpa [#allocation3], 1

</llo_original>
